<compile_context>
chip_gen: v6e
topology: v6e:2x2x1
jax: 0.10.0
libtpu: 0.0.40
codegen_flags: <defaults>
</compile_context>

<pallas_src>
import jax
import jax.numpy as jnp
from jax.experimental import pallas as pl
from jax.experimental.pallas import tpu as pltpu


def adapter_kernel(x_ref, w1_ref, w2_ref, o_ref):
    # Hot path: two MXU matmuls + VPU ReLUs on the current batch tile.
    x = x_ref[...]
    h = jnp.dot(x, w1_ref[...], preferred_element_type=jnp.float32)
    h = jnp.maximum(h, 0.0)                      # ReLU in f32 (no bf16 VPU needed)
    y = jnp.dot(h.astype(w2_ref.dtype), w2_ref[...],
                preferred_element_type=jnp.float32)
    y = jnp.maximum(y, 0.0)
    o_ref[...] = y.astype(o_ref.dtype)


def _choose_tile_b(batch, c_in, hidden, act_bytes, w_bytes, budget_bytes):
    """Largest batch tile (multiple of the sublane granularity, capped at 512)
    whose per-step VMEM footprint fits the budget."""
    gran = 8 if act_bytes >= 4 else 16  # sublane packing granularity

    def vmem_usage(tb):
        io = 2 * tb * c_in * act_bytes                      # x, double-buffered
        io += 2 * tb * c_in * act_bytes                     # out, double-buffered
        w = (c_in * hidden + hidden * c_in) * w_bytes       # weights, Buffered(1)
        tmp = tb * hidden * 4 + tb * c_in * 4               # f32 intermediates
        return io + w + tmp

    tb = min(batch, 512)
    tb = max(gran, ((tb + gran - 1) // gran) * gran)
    while tb > gran and vmem_usage(tb) > budget_bytes:
        tb = max(gran, tb // 2)
    return tb


def adapter_forward(x, w1_t, w2_t, *, tile_b=None, compute_dtype=None,
                    vmem_budget_bytes=24 * 1024 * 1024):
    """x: [B, c_in]; w1_t: [c_in, hidden]; w2_t: [hidden, c_in].

    compute_dtype: optionally cast operands (e.g. jnp.bfloat16 on v6e/v7x);
    accumulation is always f32 and the output keeps x's original dtype.
    """
    orig_dtype = x.dtype
    if compute_dtype is not None:
        x = x.astype(compute_dtype)
        w1_t = w1_t.astype(compute_dtype)
        w2_t = w2_t.astype(compute_dtype)

    B, c_in = x.shape
    c_in_w, hidden = w1_t.shape
    assert c_in_w == c_in and w2_t.shape == (hidden, c_in)

    act_bytes = jnp.dtype(x.dtype).itemsize
    w_bytes = jnp.dtype(w1_t.dtype).itemsize
    if tile_b is None:
        tile_b = _choose_tile_b(B, c_in, hidden, act_bytes, w_bytes,
                                vmem_budget_bytes)
    grid = (pl.cdiv(B, tile_b),)

    # Advisory cost hint for XLA's scheduler.
    flops = 4 * B * c_in * hidden                       # two matmuls
    bytes_accessed = (B * c_in * act_bytes              # x
                      + 2 * c_in * hidden * w_bytes     # W1 + W2
                      + B * c_in * jnp.dtype(orig_dtype).itemsize)  # out
    cost = pl.CostEstimate(flops=flops, transcendentals=0,
                           bytes_accessed=bytes_accessed)

    return pl.pallas_call(
        adapter_kernel,
        out_shape=jax.ShapeDtypeStruct((B, c_in), orig_dtype),
        grid_spec=pltpu.PrefetchScalarGridSpec(
            num_scalar_prefetch=0,
            grid=grid,
            in_specs=[
                # Batch tile of activations (double-buffered by the pipeline).
                pl.BlockSpec((tile_b, c_in), lambda i: (i, 0)),
                # Invariant weights: constant index_map + single buffer so the
                # pipeline does not reserve 2x their VMEM footprint.
                pl.BlockSpec((c_in, hidden), lambda i: (0, 0),
                             pipeline_mode=pl.Buffered(1)),
                pl.BlockSpec((hidden, c_in), lambda i: (0, 0),
                             pipeline_mode=pl.Buffered(1)),
            ],
            out_specs=pl.BlockSpec((tile_b, c_in), lambda i: (i, 0)),
        ),
        compiler_params=pltpu.CompilerParams(
            dimension_semantics=("parallel",),
            # Safe on every generation (v7x has 64 MiB physical VMEM per TC);
            # tile_b is budgeted to 24 MiB above, leaving compiler headroom.
            vmem_limit_bytes=32 * 1024 * 1024,
        ),
        cost_estimate=cost,
    )(x, w1_t, w2_t)


if __name__ == "__main__":
    # Small shapes consistent with the module: batch=8, c_in=32, reduction=4.
    B, c_in, reduction = 8, 32, 4
    hidden = c_in // reduction

    key = jax.random.PRNGKey(0)
    kx, k1, k2 = jax.random.split(key, 3)

    x = jax.random.normal(kx, (B, c_in), dtype=jnp.float32)
    # PyTorch Linear stores weight as [out, in]; pre-transpose to [in, out].
    w1 = jax.random.normal(k1, (hidden, c_in), dtype=jnp.float32) * 0.1
    w2 = jax.random.normal(k2, (c_in, hidden), dtype=jnp.float32) * 0.1

    # Reference in plain JAX (same math as the PyTorch module).
    ref = jnp.maximum(jnp.maximum(x @ w1.T, 0.0) @ w2.T, 0.0)

    # f32 path (exact-ish against the reference).
    out = adapter_forward(x, w1.T, w2.T)
    out = jax.block_until_ready(out)
    assert out.shape == (B, c_in)
    assert jnp.allclose(out, ref, atol=1e-5, rtol=1e-5)

    # bf16-operand path (v6e/v7x MXU-friendly); f32 accumulate, looser tolerance.
    out_bf16 = adapter_forward(x, w1.T, w2.T, compute_dtype=jnp.bfloat16)
    out_bf16 = jax.block_until_ready(out_bf16)
    assert out_bf16.shape == (B, c_in)
    assert jnp.allclose(out_bf16, ref, atol=5e-2, rtol=5e-2)

    print("KERNEL_OK")
</pallas_src>

<mosaic_0001>
module attributes {stable_mosaic.version = 11 : i64} {
  func.func @adapter_kernel(%arg0: i32, %arg1: memref<8x32xf32, #tpu.memory_space<vmem>>, %arg2: memref<32x8xf32, #tpu.memory_space<vmem>>, %arg3: memref<8x32xf32, #tpu.memory_space<vmem>>, %arg4: memref<8x32xf32, #tpu.memory_space<vmem>>) attributes {dimension_semantics = [#tpu.dimension_semantics<parallel>], iteration_bounds = array<i64: 1>, scalar_prefetch = 0 : i64, scratch_operands = 0 : i64, tpu.core_type = #tpu.core_type<tc>, window_params = [{transform_indices = @transform_0, window_bounds = array<i64: 8, 32>}, {pipeline_mode = #tpu.pipeline_mode<synchronous>, transform_indices = @transform_1, window_bounds = array<i64: 32, 8>}, {pipeline_mode = #tpu.pipeline_mode<synchronous>, transform_indices = @transform_2, window_bounds = array<i64: 8, 32>}, {transform_indices = @transform_3, window_bounds = array<i64: 8, 32>}]} {
    %c0 = arith.constant 0 : index
    %c0_0 = arith.constant 0 : index
    %0 = vector.load %arg1[%c0, %c0_0] : memref<8x32xf32, #tpu.memory_space<vmem>>, vector<8x32xf32>
    %c0_1 = arith.constant 0 : index
    %c0_2 = arith.constant 0 : index
    %1 = vector.load %arg2[%c0_1, %c0_2] : memref<32x8xf32, #tpu.memory_space<vmem>>, vector<32x8xf32>
    %cst = arith.constant dense<0.000000e+00> : vector<8x8xf32>
    %2 = tpu.matmul %0, %1, %cst {dimension_numbers = #tpu.dot_dimension_numbers<[1], [0], [0], [1], [0, 0, 1, 1], [], []>} : vector<8x32xf32>, vector<32x8xf32>, vector<8x8xf32> -> vector<8x8xf32>
    %cst_3 = arith.constant 0.000000e+00 : f32
    %3 = vector.broadcast %cst_3 : f32 to vector<8x8xf32>
    %4 = arith.maximumf %2, %3 : vector<8x8xf32>
    %c0_4 = arith.constant 0 : index
    %c0_5 = arith.constant 0 : index
    %5 = vector.load %arg3[%c0_4, %c0_5] : memref<8x32xf32, #tpu.memory_space<vmem>>, vector<8x32xf32>
    %cst_6 = arith.constant dense<0.000000e+00> : vector<8x32xf32>
    %6 = tpu.matmul %4, %5, %cst_6 {dimension_numbers = #tpu.dot_dimension_numbers<[1], [0], [0], [1], [0, 0, 1, 1], [], []>} : vector<8x8xf32>, vector<8x32xf32>, vector<8x32xf32> -> vector<8x32xf32>
    %cst_7 = arith.constant 0.000000e+00 : f32
    %7 = vector.broadcast %cst_7 : f32 to vector<8x32xf32>
    %8 = arith.maximumf %6, %7 : vector<8x32xf32>
    %c0_8 = arith.constant 0 : index
    %c0_9 = arith.constant 0 : index
    %9 = vector.load %arg4[%c0_8, %c0_9] : memref<8x32xf32, #tpu.memory_space<vmem>>, vector<8x32xf32>
    tpu.vector_store %arg4[%c0_8, %c0_9], %8 {strides = array<i32>} : memref<8x32xf32, #tpu.memory_space<vmem>>, vector<8x32xf32>,
    return
  }
  func.func @transform_0(%arg0: i32) -> (i32, i32) {
    %c0_i32 = arith.constant 0 : i32
    %c0_i32_0 = arith.constant 0 : i32
    return %arg0, %c0_i32 : i32, i32
  }
  func.func @transform_1(%arg0: i32) -> (i32, i32) {
    %c0_i32 = arith.constant 0 : i32
    %c0_i32_0 = arith.constant 0 : i32
    %c0_i32_1 = arith.constant 0 : i32
    return %c0_i32, %c0_i32_0 : i32, i32
  }
  func.func @transform_2(%arg0: i32) -> (i32, i32) {
    %c0_i32 = arith.constant 0 : i32
    %c0_i32_0 = arith.constant 0 : i32
    %c0_i32_1 = arith.constant 0 : i32
    return %c0_i32, %c0_i32_0 : i32, i32
  }
  func.func @transform_3(%arg0: i32) -> (i32, i32) {
    %c0_i32 = arith.constant 0 : i32
    %c0_i32_0 = arith.constant 0 : i32
    return %arg0, %c0_i32 : i32, i32
  }
}

</mosaic_0001>

<llo_original>
// kernel: tpu_custom_call.1
$region0: #{tpu_custom_call.1}
  #allocation0 [shape = 'u32[]', space=smem, size = 0x4, offset = 0x4, fixed_abs, tag = 'smem constant byte address 0x4 - core index']
  #allocation1 [shape = 'u32[144,128]{1,0:T(1,128)}', space=vmem, size = 0x12000, scoped, tag = 'internal scratch']
  %s0 = inlined_call_operand.vmem [shape: f32[8,32], index: 0, kind: input, shape index: {}]
  %s1 = inlined_call_operand.vmem [shape: f32[32,8], index: 1, kind: input, shape index: {}]
  %s2 = inlined_call_operand.vmem [shape: f32[8,32], index: 2, kind: input, shape index: {}]
  %s3 = inlined_call_operand.hbm [shape: f32[8,32], index: 3, kind: output, shape index: {}]
  %s4 = sld [smem:[#allocation0]]
  $region22: #{tpu_custom_call.1} parent=0
    _
  %s6 = ssub.s32 1, %s4
  %s7 = scalar_select 0, %s6, %s4
  $region1: #{tpu_custom_call.1} parent=0
    #allocation2 [shape = 'u8[4096]{0}', space=vmem, size = 0x1000, scoped, tag = 'output window, operand 0, single buffered']
    #allocation3 [shape = 's32[1]{0}', space=sflag, size = 0x4, scoped, tag = 'scoped memory for tpu_custom_call.1']
    %8 = vsyncpa [#allocation3], 0
    // Predicated region
    $region2: #{tpu_custom_call.1} parent=1 // pred_check
      _
    $region3: #{tpu_custom_call.1} parent=1 // pred_check_branch
      %10 = sbr.rel (0) target = $region5
    $region4: #{tpu_custom_call.1} parent=1 // pred_region
      _
    $region5: #{tpu_custom_call.1} parent=1 // pred_fallthru
      _
    // Predicated region
    $region6: #{tpu_custom_call.1} parent=1 // pred_check
      _
    $region7: #{tpu_custom_call.1} parent=1 // pred_check_branch
      %12 = sbr.rel (0) target = $region9
    $region8: #{tpu_custom_call.1} parent=1 // pred_region
      _
    $region9: #{tpu_custom_call.1} parent=1 // pred_fallthru
      _
    // Predicated region
    $region10: #{tpu_custom_call.1} parent=1 // pred_check
      _
    $region11: #{tpu_custom_call.1} parent=1 // pred_check_branch
      %14 = sbr.rel (0) target = $region13
    $region12: #{tpu_custom_call.1} parent=1 // pred_region
      _
    $region13: #{tpu_custom_call.1} parent=1 // pred_fallthru
      _
    %v15 = vld [vmem:[%s0] sm:$0xff]
    %v16 = vld [vmem:[%s1] sm:$0xff]
    %v17 = vld [vmem:[%s1 + $0x8] sm:$0xff]
    %v18 = vld [vmem:[%s1 + $0x10] sm:$0xff]
    %v19 = vld [vmem:[%s1 + $0x18] sm:$0xff]
    %vm20 = vcmask 261120
    %v22 = vsel %vm20, %v15, 0
    %24 = vmatprep.subr.mxu0 0.0
    %25 = vmatpush1.msra.mxu0 0.0
    %26 = vmatprep.subr.mxu0 0.0
    %27 = vmatpush1.msra.mxu0 0.0
    %28 = vmatprep.subr.mxu0 0.0
    %29 = vmatpush1.msra.mxu0 0.0
    %30 = vmatprep.subr.mxu0 0.0
    %31 = vmatpush1.msra.mxu0 0.0
    %32 = vmatprep.subr.mxu0 0.0
    %33 = vmatpush1.msra.mxu0 0.0
    %34 = vmatprep.subr.mxu0 0.0
    %35 = vmatpush1.msra.mxu0 0.0
    %36 = vmatprep.subr.mxu0 0.0
    %37 = vmatpush1.msra.mxu0 0.0
    %38 = vmatprep.subr.mxu0 0.0
    %39 = vmatpush1.msra.mxu0 0.0
    %40 = vmatprep.subr.mxu0 0.0
    %41 = vmatpush1.msra.mxu0 0.0
    %42 = vmatprep.subr.mxu0 0.0
    %43 = vmatpush1.msra.mxu0 0.0
    %44 = vmatprep.subr.mxu0 0.0
    %45 = vmatpush1.msra.mxu0 0.0
    %46 = vmatprep.subr.mxu0 0.0
    %47 = vmatpush1.msra.mxu0 0.0
    %48 = vmatprep.subr.mxu0 0.0
    %49 = vmatpush1.msra.mxu0 %v19
    %50 = vmatprep.subr.mxu0 0.0
    %51 = vmatpush1.msra.mxu0 %v18
    %52 = vmatprep.subr.mxu0 0.0
    %53 = vmatpush1.msra.mxu0 %v17
    %54 = vmatprep.subr.mxu0 0.0
    %55 = vmatpush1.msra.mxu0 %v16
    %56 = vmatprep.subr.mxu0 0.0
    %57 = vmatpush2.msra.mxu0 0.0
    %58 = vmatprep.subr.mxu0 0.0
    %59 = vmatpush2.msra.mxu0 0.0
    %60 = vmatprep.subr.mxu0 0.0
    %61 = vmatpush2.msra.mxu0 0.0
    %62 = vmatprep.subr.mxu0 0.0
    %63 = vmatpush2.msra.mxu0 0.0
    %64 = vmatprep.subr.mxu0 0.0
    %65 = vmatpush2.msra.mxu0 0.0
    %66 = vmatprep.subr.mxu0 0.0
    %67 = vmatpush2.msra.mxu0 0.0
    %68 = vmatprep.subr.mxu0 0.0
    %69 = vmatpush2.msra.mxu0 0.0
    %70 = vmatprep.subr.mxu0 0.0
    %71 = vmatpush2.msra.mxu0 0.0
    %72 = vmatprep.subr.mxu0 0.0
    %73 = vmatpush2.msra.mxu0 0.0
    %74 = vmatprep.subr.mxu0 0.0
    %75 = vmatpush2.msra.mxu0 0.0
    %76 = vmatprep.subr.mxu0 0.0
    %77 = vmatpush2.msra.mxu0 0.0
    %78 = vmatprep.subr.mxu0 0.0
    %79 = vmatpush2.msra.mxu0 0.0
    %80 = vmatprep.subr.mxu0 0.0
    %81 = vmatpush2.msra.mxu0 0.0
    %82 = vmatprep.subr.mxu0 0.0
    %83 = vmatpush2.msra.mxu0 0.0
    %84 = vmatprep.subr.mxu0 0.0
    %85 = vmatpush2.msra.mxu0 0.0
    %86 = vmatprep.subr.mxu0 0.0
    %87 = vmatpush2.msra.mxu0 0.0
    %88 = vmatprep.mubr.f32.mxu0 0.0
    %89 = vmatmul.mubr.f32.gmra.mxu0 %v22
    %v90 = vpop.f32.mrf.mxu0
    %v91 = vadd.f32 0.0, %v90
    %v92 = vpop.f32.mrf.mxu0
    %93 = vdwg.mxu0
    %v94 = vmax.f32 %v91, 0.0
    %v95 = vld [vmem:[%s2] sm:$0xff]
    %vm96 = vcmask 64512
    %v98 = vsel %vm96, %v94, 0
    %100 = vmatprep.subr.mxu0 0.0
    %101 = vmatpush1.msra.mxu0 0.0
    %102 = vmatprep.subr.mxu0 0.0
    %103 = vmatpush1.msra.mxu0 0.0
    %104 = vmatprep.subr.mxu0 0.0
    %105 = vmatpush1.msra.mxu0 0.0
    %106 = vmatprep.subr.mxu0 0.0
    %107 = vmatpush1.msra.mxu0 0.0
    %108 = vmatprep.subr.mxu0 0.0
    %109 = vmatpush1.msra.mxu0 0.0
    %110 = vmatprep.subr.mxu0 0.0
    %111 = vmatpush1.msra.mxu0 0.0
    %112 = vmatprep.subr.mxu0 0.0
    %113 = vmatpush1.msra.mxu0 0.0
    %114 = vmatprep.subr.mxu0 0.0
    %115 = vmatpush1.msra.mxu0 0.0
    %116 = vmatprep.subr.mxu0 0.0
    %117 = vmatpush1.msra.mxu0 0.0
    %118 = vmatprep.subr.mxu0 0.0
    %119 = vmatpush1.msra.mxu0 0.0
    %120 = vmatprep.subr.mxu0 0.0
    %121 = vmatpush1.msra.mxu0 0.0
    %122 = vmatprep.subr.mxu0 0.0
    %123 = vmatpush1.msra.mxu0 0.0
    %124 = vmatprep.subr.mxu0 0.0
    %125 = vmatpush1.msra.mxu0 0.0
    %126 = vmatprep.subr.mxu0 0.0
    %127 = vmatpush1.msra.mxu0 0.0
    %128 = vmatprep.subr.mxu0 0.0
    %129 = vmatpush1.msra.mxu0 0.0
    %130 = vmatprep.subr.mxu0 0.0
    %131 = vmatpush1.msra.mxu0 %v95
    %132 = vmatprep.subr.mxu0 0.0
    %133 = vmatpush2.msra.mxu0 0.0
    %134 = vmatprep.subr.mxu0 0.0
    %135 = vmatpush2.msra.mxu0 0.0
    %136 = vmatprep.subr.mxu0 0.0
    %137 = vmatpush2.msra.mxu0 0.0
    %138 = vmatprep.subr.mxu0 0.0
    %139 = vmatpush2.msra.mxu0 0.0
    %140 = vmatprep.subr.mxu0 0.0
    %141 = vmatpush2.msra.mxu0 0.0
    %142 = vmatprep.subr.mxu0 0.0
    %143 = vmatpush2.msra.mxu0 0.0
    %144 = vmatprep.subr.mxu0 0.0
    %145 = vmatpush2.msra.mxu0 0.0
    %146 = vmatprep.subr.mxu0 0.0
    %147 = vmatpush2.msra.mxu0 0.0
    %148 = vmatprep.subr.mxu0 0.0
    %149 = vmatpush2.msra.mxu0 0.0
    %150 = vmatprep.subr.mxu0 0.0
    %151 = vmatpush2.msra.mxu0 0.0
    %152 = vmatprep.subr.mxu0 0.0
    %153 = vmatpush2.msra.mxu0 0.0
    %154 = vmatprep.subr.mxu0 0.0
    %155 = vmatpush2.msra.mxu0 0.0
    %156 = vmatprep.subr.mxu0 0.0
    %157 = vmatpush2.msra.mxu0 0.0
    %158 = vmatprep.subr.mxu0 0.0
    %159 = vmatpush2.msra.mxu0 0.0
    %160 = vmatprep.subr.mxu0 0.0
    %161 = vmatpush2.msra.mxu0 0.0
    %162 = vmatprep.subr.mxu0 0.0
    %163 = vmatpush2.msra.mxu0 0.0
    %164 = vmatprep.mubr.f32.mxu0 0.0
    %165 = vmatmul.mubr.f32.gmra.mxu0 %v98
    %v166 = vpop.f32.mrf.mxu0
    %v167 = vadd.f32 0.0, %v166
    %v168 = vpop.f32.mrf.mxu0
    %169 = vdwg.mxu0
    %v170 = vmax.f32 %v167, 0.0
    %171 = vst.msk [vmem:[#allocation2] sm:$0xff] %vm20, %v170
    // Predicated region
    $region14: #{tpu_custom_call.1} parent=1 // pred_check
      _
    $region15: #{tpu_custom_call.1} parent=1 // pred_check_branch
      %173 = sbr.rel (0) target = $region17
    $region16: #{tpu_custom_call.1} parent=1 // pred_region
      %s175 = ssub.s32 128, 128
      %176 = vsyncadd [#allocation3], %s175
      %s178 = sshll.u32 [#allocation2], 4
      %s179 = int_to_ptr.vmem [resolvable:$true] %s178
      %181 = dma.vmem_to_hbm [thread:$0]  %s179, 128, %s3, [#allocation3]
    $region17: #{tpu_custom_call.1} parent=1 // pred_fallthru
      _
    // Predicated region
    $region18: #{tpu_custom_call.1} parent=1 // pred_check
      _
    $region19: #{tpu_custom_call.1} parent=1 // pred_check_branch
      %183 = sbr.rel (0) target = $region21
    $region20: #{tpu_custom_call.1} parent=1 // pred_region
      %184 = dma.done [#allocation3], 128
    $region21: #{tpu_custom_call.1} parent=1 // pred_fallthru
      _
    %185 = vsyncpa [#allocation3], 1

</llo_original>
